<compile_context>
chip_gen: v7x
topology: tpu7x:2x2x1
jax: 0.10.0
libtpu: 0.0.40
codegen_flags: <defaults>
</compile_context>

<pallas_src>
import functools

import jax
import jax.numpy as jnp
import numpy as np
from jax.experimental import pallas as pl
from jax.experimental.pallas import tpu as pltpu

RES_CH = 8            # forced by nn.BatchNorm1d(8) applied directly to `inputs`
SKIP_CH = 16
KERNEL = 3
DILATION = 2
BN_EPS = 1e-5


def wavenet_block_kernel(x_ref, pw_ref, wrs_ref, res_ref, skip_ref,
                         *, seg_len, kernel_size, dilation):
    """x_ref: (C, N*L) activations.
    pw_ref: (C, 4 + K*C) packed [bd | br | gamma | beta | wd_flat] per-channel params.
    wrs_ref: (C+Cs, C) packed [residual_conv ; skip_conv] 1x1 weights."""
    C, M = x_ref.shape
    KC = kernel_size * C
    pad = (kernel_size - 1) * dilation // 2

    # -------- unpack the packed parameter slab (one DMA, one vreg tile) --------
    pw = pw_ref[...].astype(jnp.float32)
    bd = pw[:, 0:1]                      # (C, 1) dilated-conv bias
    br = pw[:, 1:2]                      # (C, 1) residual-conv bias
    gamma = pw[:, 2:3]                   # (C, 1) BN weight
    beta = pw[:, 3:4]                    # (C, 1) BN bias
    wd_flat = pw[:, 4:4 + KC]            # (C, K*C) dilated-conv weight, cols = k*C + ci

    x = x_ref[...].astype(jnp.float32)   # raw input (C, N*L), kept for the residual add

    # -------- BatchNorm1d: training-mode biased batch stats per channel over (N, L) ----
    inv_cnt = 1.0 / M
    mean_c = jnp.sum(x, axis=1, keepdims=True) * inv_cnt
    ex2_c = jnp.sum(x * x, axis=1, keepdims=True) * inv_cnt
    var_c = ex2_c - mean_c * mean_c
    inv_std = jax.lax.rsqrt(var_c + BN_EPS)
    scale = gamma * inv_std
    shift = beta - mean_c * scale
    xbn = x * scale + shift              # (C, N*L)

    # -------- dilated conv: all K taps + all batches fused into ONE matmul -------------
    # Batches are concatenated along lanes; per-segment masks reproduce the zero "same"
    # padding and stop rolled taps from leaking across batch boundaries.
    t_local = jax.lax.broadcasted_iota(jnp.int32, (C, M), 1) % seg_len
    taps = []
    for k in range(kernel_size):
        offset = k * dilation - pad      # static: -2, 0, +2
        if offset == 0:
            taps.append(xbn)
        else:
            rolled = pltpu.roll(xbn, shift=(-offset) % M, axis=1)
            valid = jnp.logical_and(t_local + offset >= 0, t_local + offset < seg_len)
            taps.append(jnp.where(valid, rolled, 0.0))
    stacked = jnp.concatenate(taps, axis=0)                                  # (K*C, N*L)

    dil = jnp.dot(wd_flat, stacked, preferred_element_type=jnp.float32) + bd  # (C, N*L)

    # -------- fused 1x1 residual + skip convs: ONE matmul, split output rows ------------
    rs = jnp.dot(wrs_ref[...], dil, preferred_element_type=jnp.float32)       # (C+Cs, N*L)
    res_ref[...] = (rs[:C, :] + br + x).astype(res_ref.dtype)   # residual adds RAW input
    skip_ref[...] = rs[C:, :].astype(skip_ref.dtype)


def wavenet_block(x, wd, bd, ws, wr, br, gamma, beta):
    """x: (N, C, L); wd: (C, C, K) torch Conv1d layout; bd/br/gamma/beta: (C,);
    ws: (Cs, C); wr: (C, C).  Returns (res_out (N,C,L), skip_out (N,Cs,L))."""
    N, C, L = x.shape
    Cs = ws.shape[0]
    K = wd.shape[2]
    M = N * L

    # Layout plumbing outside the kernel (cheap XLA ops): lane-dense activation slab
    # plus two packed parameter buffers.
    x2 = jnp.transpose(x, (1, 0, 2)).reshape(C, M)                     # (C, N*L)
    wd_flat = jnp.transpose(wd, (0, 2, 1)).reshape(C, K * C)           # cols = k*C + ci
    pw = jnp.concatenate([bd[:, None], br[:, None], gamma[:, None],
                          beta[:, None], wd_flat], axis=1)             # (C, 4 + K*C)
    wrs = jnp.concatenate([wr, ws], axis=0)                            # (C+Cs, C)

    kernel = functools.partial(wavenet_block_kernel, seg_len=L,
                               kernel_size=K, dilation=DILATION)
    res2, skip2 = pl.pallas_call(
        kernel,
        out_shape=(jax.ShapeDtypeStruct((C, M), jnp.float32),
                   jax.ShapeDtypeStruct((Cs, M), jnp.float32)),
        grid=(1,),
        in_specs=[
            pl.BlockSpec((C, M), lambda i: (0, 0)),              # activations
            pl.BlockSpec((C, 4 + K * C), lambda i: (0, 0)),      # packed biases/BN/conv wts
            pl.BlockSpec((C + Cs, C), lambda i: (0, 0)),         # packed 1x1 weights
        ],
        out_specs=(
            pl.BlockSpec((C, M), lambda i: (0, 0)),
            pl.BlockSpec((Cs, M), lambda i: (0, 0)),
        ),
    )(x2, pw, wrs)

    res = jnp.transpose(res2.reshape(C, N, L), (1, 0, 2))
    skip = jnp.transpose(skip2.reshape(Cs, N, L), (1, 0, 2))
    return res, skip


def reference_forward(x, wd, bd, ws, wr, br, gamma, beta):
    """Pure NumPy (float64) reference of the PyTorch module's forward pass."""
    x = np.asarray(x, np.float64)
    wd = np.asarray(wd, np.float64); bd = np.asarray(bd, np.float64)
    ws = np.asarray(ws, np.float64); wr = np.asarray(wr, np.float64)
    br = np.asarray(br, np.float64)
    gamma = np.asarray(gamma, np.float64); beta = np.asarray(beta, np.float64)
    N, C, L = x.shape
    K = wd.shape[2]
    pad = (K - 1) * DILATION // 2

    mean = x.mean(axis=(0, 2), keepdims=True)
    var = x.var(axis=(0, 2), keepdims=True)                  # biased (training mode)
    xbn = (x - mean) / np.sqrt(var + BN_EPS)
    xbn = xbn * gamma.reshape(1, C, 1) + beta.reshape(1, C, 1)

    xpad = np.pad(xbn, ((0, 0), (0, 0), (pad, pad)))
    dil = np.zeros_like(x)
    for k in range(K):
        dil += np.einsum('oc,ncl->nol', wd[:, :, k],
                         xpad[:, :, k * DILATION:k * DILATION + L])
    dil += bd.reshape(1, C, 1)

    skip = np.einsum('sc,ncl->nsl', ws, dil)
    res = np.einsum('oc,ncl->nol', wr, dil) + br.reshape(1, C, 1) + x
    return res, skip


if __name__ == "__main__":
    N, C, L, Cs, K = 2, RES_CH, 128, SKIP_CH, KERNEL
    key = jax.random.PRNGKey(0)
    k_x, k_wd, k_bd, k_ws, k_wr, k_br = jax.random.split(key, 6)

    x = jax.random.normal(k_x, (N, C, L), jnp.float32)
    # module.init_weights uses N(0, 0.01); torch Conv1d weight layout is (C_out, C_in, K).
    wd = 0.01 * jax.random.normal(k_wd, (C, C, K), jnp.float32)
    bd = 0.01 * jax.random.normal(k_bd, (C,), jnp.float32)
    ws = 0.01 * jax.random.normal(k_ws, (Cs, C), jnp.float32)   # skip_conv (bias=False)
    wr = 0.01 * jax.random.normal(k_wr, (C, C), jnp.float32)
    br = 0.01 * jax.random.normal(k_br, (C,), jnp.float32)
    gamma = jnp.ones((C,), jnp.float32)      # BatchNorm1d affine defaults
    beta = jnp.zeros((C,), jnp.float32)

    res_out, skip_out = jax.jit(wavenet_block)(x, wd, bd, ws, wr, br, gamma, beta)
    jax.block_until_ready((res_out, skip_out))
    assert res_out.shape == (N, C, L) and skip_out.shape == (N, Cs, L)

    res_ref, skip_ref = reference_forward(x, wd, bd, ws, wr, br, gamma, beta)
    np.testing.assert_allclose(np.asarray(res_out), res_ref, rtol=2e-4, atol=2e-4)
    np.testing.assert_allclose(np.asarray(skip_out), skip_ref, rtol=2e-4, atol=2e-4)
    print("KERNEL_OK")
</pallas_src>

<mosaic_0001>
module attributes {stable_mosaic.version = 11 : i64} {
  func.func @wavenet_block_kernel(%arg0: i32, %arg1: memref<8x256xf32, #tpu.memory_space<vmem>>, %arg2: memref<8x28xf32, #tpu.memory_space<vmem>>, %arg3: memref<24x8xf32, #tpu.memory_space<vmem>>, %arg4: memref<8x256xf32, #tpu.memory_space<vmem>>, %arg5: memref<16x256xf32, #tpu.memory_space<vmem>>) attributes {dimension_semantics = [#tpu.dimension_semantics<arbitrary>], iteration_bounds = array<i64: 1>, scalar_prefetch = 0 : i64, scratch_operands = 0 : i64, tpu.core_type = #tpu.core_type<tc>, window_params = [{pipeline_mode = #tpu.pipeline_mode<synchronous>, transform_indices = @transform_0, window_bounds = array<i64: 8, 256>}, {pipeline_mode = #tpu.pipeline_mode<synchronous>, transform_indices = @transform_1, window_bounds = array<i64: 8, 28>}, {pipeline_mode = #tpu.pipeline_mode<synchronous>, transform_indices = @transform_2, window_bounds = array<i64: 24, 8>}, {pipeline_mode = #tpu.pipeline_mode<synchronous>, transform_indices = @transform_3, window_bounds = array<i64: 8, 256>}, {pipeline_mode = #tpu.pipeline_mode<synchronous>, transform_indices = @transform_4, window_bounds = array<i64: 16, 256>}]} {
    %c0 = arith.constant 0 : index
    %c0_0 = arith.constant 0 : index
    %0 = vector.load %arg2[%c0, %c0_0] : memref<8x28xf32, #tpu.memory_space<vmem>>, vector<8x28xf32>
    %1 = vector.extract_strided_slice %0 {offsets = [0, 0], sizes = [8, 1], strides = [1, 1]} : vector<8x28xf32> to vector<8x1xf32>
    %2 = vector.extract_strided_slice %0 {offsets = [0, 1], sizes = [8, 1], strides = [1, 1]} : vector<8x28xf32> to vector<8x1xf32>
    %3 = vector.extract_strided_slice %0 {offsets = [0, 2], sizes = [8, 1], strides = [1, 1]} : vector<8x28xf32> to vector<8x1xf32>
    %4 = vector.extract_strided_slice %0 {offsets = [0, 3], sizes = [8, 1], strides = [1, 1]} : vector<8x28xf32> to vector<8x1xf32>
    %5 = vector.extract_strided_slice %0 {offsets = [0, 4], sizes = [8, 24], strides = [1, 1]} : vector<8x28xf32> to vector<8x24xf32>
    %c0_1 = arith.constant 0 : index
    %c0_2 = arith.constant 0 : index
    %6 = vector.load %arg1[%c0_1, %c0_2] : memref<8x256xf32, #tpu.memory_space<vmem>>, vector<8x256xf32>
    %cst = arith.constant dense<0.000000e+00> : vector<8xf32>
    %7 = vector.multi_reduction <add>, %6, %cst [1] : vector<8x256xf32> to vector<8xf32>
    %8 = vector.shape_cast %7 : vector<8xf32> to vector<8x1xf32>
    %cst_3 = arith.constant 3.906250e-03 : f32
    %9 = vector.broadcast %cst_3 : f32 to vector<8x1xf32>
    %10 = arith.mulf %8, %9 : vector<8x1xf32>
    %11 = arith.mulf %6, %6 : vector<8x256xf32>
    %cst_4 = arith.constant dense<0.000000e+00> : vector<8xf32>
    %12 = vector.multi_reduction <add>, %11, %cst_4 [1] : vector<8x256xf32> to vector<8xf32>
    %13 = vector.shape_cast %12 : vector<8xf32> to vector<8x1xf32>
    %cst_5 = arith.constant 3.906250e-03 : f32
    %14 = vector.broadcast %cst_5 : f32 to vector<8x1xf32>
    %15 = arith.mulf %13, %14 : vector<8x1xf32>
    %16 = arith.mulf %10, %10 : vector<8x1xf32>
    %17 = arith.subf %15, %16 : vector<8x1xf32>
    %cst_6 = arith.constant 9.99999974E-6 : f32
    %18 = vector.broadcast %cst_6 : f32 to vector<8x1xf32>
    %19 = arith.addf %17, %18 : vector<8x1xf32>
    %20 = math.rsqrt %19 : vector<8x1xf32>
    %21 = arith.mulf %3, %20 : vector<8x1xf32>
    %22 = arith.mulf %10, %21 : vector<8x1xf32>
    %23 = arith.subf %4, %22 : vector<8x1xf32>
    %24 = vector.broadcast %21 : vector<8x1xf32> to vector<8x256xf32>
    %25 = arith.mulf %6, %24 : vector<8x256xf32>
    %26 = vector.broadcast %23 : vector<8x1xf32> to vector<8x256xf32>
    %27 = arith.addf %25, %26 : vector<8x256xf32>
    %28 = tpu.iota {dimensions = array<i32: 1>} : vector<8x256xi32>
    %c128_i32 = arith.constant 128 : i32
    %c0_i32 = arith.constant 0 : i32
    %29 = arith.cmpi eq, %c128_i32, %c0_i32 : i32
    %c1_i32 = arith.constant 1 : i32
    %30 = arith.select %29, %c1_i32, %c128_i32 : i32
    %31 = vector.broadcast %30 : i32 to vector<8x256xi32>
    %32 = arith.remsi %28, %31 : vector<8x256xi32>
    %c0_i32_7 = arith.constant 0 : i32
    %33 = vector.broadcast %c0_i32_7 : i32 to vector<8x256xi32>
    %34 = arith.cmpi ne, %32, %33 : vector<8x256xi32>
    %c0_i32_8 = arith.constant 0 : i32
    %35 = vector.broadcast %c0_i32_8 : i32 to vector<8x256xi32>
    %36 = arith.cmpi slt, %32, %35 : vector<8x256xi32>
    %c0_i32_9 = arith.constant 0 : i32
    %37 = arith.cmpi slt, %30, %c0_i32_9 : i32
    %38 = vector.broadcast %37 : i1 to vector<8x256xi1>
    %39 = vector.broadcast %38 : vector<8x256xi1> to vector<8x256xi1>
    %40 = arith.xori %36, %39 : vector<8x256xi1>
    %41 = arith.andi %40, %34 : vector<8x256xi1>
    %42 = vector.broadcast %30 : i32 to vector<8x256xi32>
    %43 = arith.addi %32, %42 : vector<8x256xi32>
    %44 = arith.select %41, %43, %32 : vector<8x256xi1>, vector<8x256xi32>
    %c2_i32 = arith.constant 2 : i32
    %45 = tpu.dynamic_rotate %27 by %c2_i32 dim 1 : vector<8x256xf32>, i32 -> vector<8x256xf32>
    %c-2_i32 = arith.constant -2 : i32
    %46 = vector.broadcast %c-2_i32 : i32 to vector<8x256xi32>
    %47 = arith.addi %44, %46 : vector<8x256xi32>
    %c0_i32_10 = arith.constant 0 : i32
    %48 = vector.broadcast %c0_i32_10 : i32 to vector<8x256xi32>
    %49 = arith.cmpi sge, %47, %48 : vector<8x256xi32>
    %c-2_i32_11 = arith.constant -2 : i32
    %50 = vector.broadcast %c-2_i32_11 : i32 to vector<8x256xi32>
    %51 = arith.addi %44, %50 : vector<8x256xi32>
    %c128_i32_12 = arith.constant 128 : i32
    %52 = vector.broadcast %c128_i32_12 : i32 to vector<8x256xi32>
    %53 = arith.cmpi slt, %51, %52 : vector<8x256xi32>
    %54 = arith.andi %49, %53 : vector<8x256xi1>
    %cst_13 = arith.constant 0.000000e+00 : f32
    %55 = vector.broadcast %cst_13 : f32 to vector<8x256xf32>
    %56 = arith.select %54, %45, %55 : vector<8x256xi1>, vector<8x256xf32>
    %c254_i32 = arith.constant 254 : i32
    %57 = tpu.dynamic_rotate %27 by %c254_i32 dim 1 : vector<8x256xf32>, i32 -> vector<8x256xf32>
    %c2_i32_14 = arith.constant 2 : i32
    %58 = vector.broadcast %c2_i32_14 : i32 to vector<8x256xi32>
    %59 = arith.addi %44, %58 : vector<8x256xi32>
    %c0_i32_15 = arith.constant 0 : i32
    %60 = vector.broadcast %c0_i32_15 : i32 to vector<8x256xi32>
    %61 = arith.cmpi sge, %59, %60 : vector<8x256xi32>
    %c2_i32_16 = arith.constant 2 : i32
    %62 = vector.broadcast %c2_i32_16 : i32 to vector<8x256xi32>
    %63 = arith.addi %44, %62 : vector<8x256xi32>
    %c128_i32_17 = arith.constant 128 : i32
    %64 = vector.broadcast %c128_i32_17 : i32 to vector<8x256xi32>
    %65 = arith.cmpi slt, %63, %64 : vector<8x256xi32>
    %66 = arith.andi %61, %65 : vector<8x256xi1>
    %cst_18 = arith.constant 0.000000e+00 : f32
    %67 = vector.broadcast %cst_18 : f32 to vector<8x256xf32>
    %68 = arith.select %66, %57, %67 : vector<8x256xi1>, vector<8x256xf32>
    %69 = tpu.concatenate %56, %27, %68 in 0 : vector<8x256xf32>, vector<8x256xf32>, vector<8x256xf32> -> vector<24x256xf32>
    %cst_19 = arith.constant dense<0.000000e+00> : vector<8x256xf32>
    %70 = tpu.matmul %5, %69, %cst_19 {dimension_numbers = #tpu.dot_dimension_numbers<[1], [0], [0], [1], [0, 0, 1, 1], [], []>} : vector<8x24xf32>, vector<24x256xf32>, vector<8x256xf32> -> vector<8x256xf32>
    %71 = vector.broadcast %1 : vector<8x1xf32> to vector<8x256xf32>
    %72 = arith.addf %70, %71 : vector<8x256xf32>
    %c0_20 = arith.constant 0 : index
    %c0_21 = arith.constant 0 : index
    %73 = vector.load %arg3[%c0_20, %c0_21] : memref<24x8xf32, #tpu.memory_space<vmem>>, vector<24x8xf32>
    %cst_22 = arith.constant dense<0.000000e+00> : vector<24x256xf32>
    %74 = tpu.matmul %73, %72, %cst_22 {dimension_numbers = #tpu.dot_dimension_numbers<[1], [0], [0], [1], [0, 0, 1, 1], [], []>} : vector<24x8xf32>, vector<8x256xf32>, vector<24x256xf32> -> vector<24x256xf32>
    %75 = vector.extract_strided_slice %74 {offsets = [0, 0], sizes = [8, 256], strides = [1, 1]} : vector<24x256xf32> to vector<8x256xf32>
    %76 = vector.broadcast %2 : vector<8x1xf32> to vector<8x256xf32>
    %77 = arith.addf %75, %76 : vector<8x256xf32>
    %78 = arith.addf %77, %6 : vector<8x256xf32>
    %c0_23 = arith.constant 0 : index
    %c0_24 = arith.constant 0 : index
    %79 = vector.load %arg4[%c0_23, %c0_24] : memref<8x256xf32, #tpu.memory_space<vmem>>, vector<8x256xf32>
    tpu.vector_store %arg4[%c0_23, %c0_24], %78 {strides = array<i32>} : memref<8x256xf32, #tpu.memory_space<vmem>>, vector<8x256xf32>,
    %80 = vector.extract_strided_slice %74 {offsets = [8, 0], sizes = [16, 256], strides = [1, 1]} : vector<24x256xf32> to vector<16x256xf32>
    %c0_25 = arith.constant 0 : index
    %c0_26 = arith.constant 0 : index
    %81 = vector.load %arg5[%c0_25, %c0_26] : memref<16x256xf32, #tpu.memory_space<vmem>>, vector<16x256xf32>
    tpu.vector_store %arg5[%c0_25, %c0_26], %80 {strides = array<i32>} : memref<16x256xf32, #tpu.memory_space<vmem>>, vector<16x256xf32>,
    return
  }
  func.func @transform_0(%arg0: i32) -> (i32, i32) {
    %c0_i32 = arith.constant 0 : i32
    %c0_i32_0 = arith.constant 0 : i32
    %c0_i32_1 = arith.constant 0 : i32
    return %c0_i32, %c0_i32_0 : i32, i32
  }
  func.func @transform_1(%arg0: i32) -> (i32, i32) {
    %c0_i32 = arith.constant 0 : i32
    %c0_i32_0 = arith.constant 0 : i32
    %c0_i32_1 = arith.constant 0 : i32
    return %c0_i32, %c0_i32_0 : i32, i32
  }
  func.func @transform_2(%arg0: i32) -> (i32, i32) {
    %c0_i32 = arith.constant 0 : i32
    %c0_i32_0 = arith.constant 0 : i32
    %c0_i32_1 = arith.constant 0 : i32
    return %c0_i32, %c0_i32_0 : i32, i32
  }
  func.func @transform_3(%arg0: i32) -> (i32, i32) {
    %c0_i32 = arith.constant 0 : i32
    %c0_i32_0 = arith.constant 0 : i32
    %c0_i32_1 = arith.constant 0 : i32
    return %c0_i32, %c0_i32_0 : i32, i32
  }
  func.func @transform_4(%arg0: i32) -> (i32, i32) {
    %c0_i32 = arith.constant 0 : i32
    %c0_i32_0 = arith.constant 0 : i32
    %c0_i32_1 = arith.constant 0 : i32
    return %c0_i32, %c0_i32_0 : i32, i32
  }
}

</mosaic_0001>

<llo_original>
// kernel: wavenet_block.1
$region0: #{wavenet_block.1}
  #allocation0 [shape = 'u32[]', space=smem, size = 0x4, offset = 0x4, fixed_abs, tag = 'smem constant byte address 0x4 - core index']
  #allocation1 [shape = 'u32[144,128]{1,0:T(1,128)}', space=vmem, size = 0x12000, scoped, tag = 'internal scratch']
  %s0 = inlined_call_operand.vmem [shape: f32[8,256], index: 0, kind: input, shape index: {}]
  %s1 = inlined_call_operand.vmem [shape: f32[8,28], index: 1, kind: input, shape index: {}]
  %s2 = inlined_call_operand.vmem [shape: f32[24,8], index: 2, kind: input, shape index: {}]
  %s3 = inlined_call_operand.hbm [shape: f32[8,256], index: 3, kind: output, shape index: {0}]
  %s4 = inlined_call_operand.vmem [shape: f32[16,256], index: 4, kind: output, shape index: {1}]
  %5 = xla_tuple %s3, %s4
  %s6 = sld [smem:[#allocation0]]
  $region30: #{wavenet_block.1} parent=0
    _
  %s8 = ssub.s32 1, %s6
  %s9 = scalar_select 0, %s8, %s6
  $region1: #{wavenet_block.1} parent=0
    #allocation2 [shape = 'u8[8192]{0}', space=vmem, size = 0x2000, scoped, tag = 'output window, operand 0, single buffered']
    #allocation3 [shape = 's32[1]{0}', space=sflag, size = 0x4, scoped, tag = 'scoped memory for wavenet_block.1']
    %10 = vsyncpa [#allocation3], 0
    // Predicated region
    $region2: #{wavenet_block.1} parent=1 // pred_check
      _
    $region3: #{wavenet_block.1} parent=1 // pred_check_branch
      %12 = sbr.rel (0) target = $region5
    $region4: #{wavenet_block.1} parent=1 // pred_region
      _
    $region5: #{wavenet_block.1} parent=1 // pred_fallthru
      _
    // Predicated region
    $region6: #{wavenet_block.1} parent=1 // pred_check
      _
    $region7: #{wavenet_block.1} parent=1 // pred_check_branch
      %14 = sbr.rel (0) target = $region9
    $region8: #{wavenet_block.1} parent=1 // pred_region
      _
    $region9: #{wavenet_block.1} parent=1 // pred_fallthru
      _
    // Predicated region
    $region10: #{wavenet_block.1} parent=1 // pred_check
      _
    $region11: #{wavenet_block.1} parent=1 // pred_check_branch
      %16 = sbr.rel (0) target = $region13
    $region12: #{wavenet_block.1} parent=1 // pred_region
      _
    $region13: #{wavenet_block.1} parent=1 // pred_fallthru
      _
    %v17 = vld [vmem:[%s1] sm:$0xff]
    %v18 = vld [vmem:[%s0] sm:$0xff]
    %v19 = vld [vmem:[%s0 + $0x8] sm:$0xff]
    %v20 = vadd.f32 %v18, %v19
    %21 = vadd.xlane.f32.xlu0 %v20
    %v22 = vpop.xlane.xlu0 %21
    %v23 = vmul.f32 %v22, 0.00390625
    %v24 = vmul.f32 %v18, %v18
    %v25 = vmul.f32 %v19, %v19
    %v26 = vadd.f32 %v24, %v25
    %27 = vadd.xlane.f32.xlu0 %v26
    %v28 = vpop.xlane.xlu0 %27
    %v29 = vmul.f32 %v28, 0.00390625
    %v30 = vmul.f32 %v23, %v23
    %v31 = vsub.f32 %v29, %v30
    %v32 = vadd.f32 %v31, 1e-05
    %v33 = vrsqrt.pop %v32
    %v34 = vmul.f32 %v17, %v33
    %v35 = vmul.f32 %v23, %v34
    %37 = vrot.lane.b32.xlu0 %v35, 1
    %v38 = vpop.permute.xlu0 %37
    %v40 = vsub.f32 %v17, %v38
    %42 = vset.pattern.permute.xlu0 2
    %43 = vperm.xlu0 %42, %v34
    %v44 = vpop.permute.xlu0 %43
    %v46 = vmul.f32 %v18, %v44
    %v47 = vmul.f32 %v19, %v44
    %49 = vset.pattern.permute.xlu0 3
    %50 = vperm.xlu0 %49, %v40
    %v51 = vpop.permute.xlu0 %50
    %v53 = vadd.f32 %v46, %v51
    %v54 = vadd.f32 %v47, %v51
    %v55 = vlaneseq
    %v56 = vand.u32 %v55, 127
    %v57 = vadd.s32 %v56, 128
    %vm58 = vcmp.lt.s32.totalorder %v56, 0
    %v59 = vsub.s32 0, %v56
    %v60 = vsel %vm58, %v59, %v56
    %v61 = vshrl.u32 %v60, 7
    %v62 = vand.u32 %v60, 127
    %v63 = vsub.s32 0, %v62
    %v64 = vsel %vm58, %v63, %v62
    %vm65 = vcmp.lt.s32.totalorder %v57, 0
    %v66 = vsub.s32 0, %v57
    %v67 = vsel %vm65, %v66, %v57
    %v68 = vshrl.u32 %v67, 7
    %v69 = vand.u32 %v67, 127
    %v70 = vsub.s32 0, %v69
    %v71 = vsel %vm65, %v70, %v69
    %vm72 = vcmp.ne.s32.totalorder %v64, 0
    %vm73 = vcmp.ne.s32.totalorder %v71, 0
    %vm74 = vcmp.lt.s32.totalorder %v64, 0
    %vm75 = vcmp.lt.s32.totalorder %v71, 0
    %vm76 = vmand %vm74, %vm72
    %vm77 = vmand %vm75, %vm73
    %v78 = vadd.s32 %v64, 128
    %v79 = vadd.s32 %v71, 128
    %v80 = vsel %vm76, %v78, %v64
    %v81 = vsel %vm77, %v79, %v71
    %82 = vrot.lane.b32.xlu0 %v53, 2
    %v83 = vpop.permute.xlu0 %82
    %84 = vrot.lane.b32.xlu0 %v54, 2
    %v85 = vpop.permute.xlu0 %84
    %vm86 = vcmp.lt.s32.totalorder %v56, 2
    %v87 = vsel %vm86, %v83, %v85
    %v88 = vsel %vm86, %v85, %v83
    %v89 = vadd.s32 %v80, 4294967294
    %v90 = vadd.s32 %v81, 4294967294
    %vm91 = vcmp.ge.s32.totalorder %v89, 0
    %vm92 = vcmp.ge.s32.totalorder %v90, 0
    %vm93 = vcmp.lt.s32.totalorder %v89, 128
    %vm94 = vcmp.lt.s32.totalorder %v90, 128
    %vm95 = vmand %vm91, %vm93
    %vm96 = vmand %vm92, %vm94
    %v97 = vsel %vm95, %v88, 0.0
    %v98 = vsel %vm96, %v87, 0.0
    %99 = vrot.lane.b32.xlu0 %v53, 126
    %v100 = vpop.permute.xlu0 %99
    %101 = vrot.lane.b32.xlu0 %v54, 126
    %v102 = vpop.permute.xlu0 %101
    %vm103 = vcmp.lt.s32.totalorder %v56, 126
    %v104 = vsel %vm103, %v100, %v102
    %v105 = vsel %vm103, %v102, %v100
    %v106 = vadd.s32 %v80, 2
    %v107 = vadd.s32 %v81, 2
    %vm108 = vcmp.ge.s32.totalorder %v106, 0
    %vm109 = vcmp.ge.s32.totalorder %v107, 0
    %vm110 = vcmp.lt.s32.totalorder %v106, 128
    %vm111 = vcmp.lt.s32.totalorder %v107, 128
    %vm112 = vmand %vm108, %vm110
    %vm113 = vmand %vm109, %vm111
    %v114 = vsel %vm112, %v104, 0.0
    %v115 = vsel %vm113, %v105, 0.0
    %117 = vset.pattern.permute.xlu0 0
    %118 = vperm.xlu0 %117, %v17
    %v119 = vpop.permute.xlu0 %118
    %121 = vrot.lane.b32.xlu0 %v17, 124
    %v122 = vpop.permute.xlu0 %121
    %vm123 = vcmask 195584
    %v124 = vsel %vm123, %v122, 0
    %126 = vmatprep.subr.mxu0 %v98
    %127 = vmatpush1.msra.mxu0 %v97
    %128 = vmatprep.subr.mxu0 %v54
    %129 = vmatpush1.msra.mxu0 %v53
    %130 = vmatprep.subr.mxu0 %v115
    %131 = vmatpush1.msra.mxu0 %v114
    %132 = vmatprep.subr.mxu0 0.0
    %133 = vmatpush1.msra.mxu0 0.0
    %134 = vmatprep.subr.mxu0 0.0
    %135 = vmatpush1.msra.mxu0 0.0
    %136 = vmatprep.subr.mxu0 0.0
    %137 = vmatpush1.msra.mxu0 0.0
    %138 = vmatprep.subr.mxu0 0.0
    %139 = vmatpush1.msra.mxu0 0.0
    %140 = vmatprep.subr.mxu0 0.0
    %141 = vmatpush1.msra.mxu0 0.0
    %142 = vmatprep.subr.mxu0 0.0
    %143 = vmatpush1.msra.mxu0 0.0
    %144 = vmatprep.subr.mxu0 0.0
    %145 = vmatpush1.msra.mxu0 0.0
    %146 = vmatprep.subr.mxu0 0.0
    %147 = vmatpush1.msra.mxu0 0.0
    %148 = vmatprep.subr.mxu0 0.0
    %149 = vmatpush1.msra.mxu0 0.0
    %150 = vmatprep.subr.mxu0 0.0
    %151 = vmatpush1.msra.mxu0 0.0
    %152 = vmatprep.subr.mxu0 0.0
    %153 = vmatpush1.msra.mxu0 0.0
    %154 = vmatprep.subr.mxu0 0.0
    %155 = vmatpush1.msra.mxu0 0.0
    %156 = vmatprep.subr.mxu0 0.0
    %157 = vmatpush1.msra.mxu0 0.0
    %158 = vmatprep.subr.mxu0 0.0
    %159 = vmatpush1.msra.mxu0 0.0
    %160 = vmatprep.subr.mxu0 0.0
    %161 = vmatpush1.msra.mxu0 0.0
    %162 = vmatprep.subr.mxu0 0.0
    %163 = vmatpush1.msra.mxu0 0.0
    %164 = vmatprep.subr.mxu0 0.0
    %165 = vmatpush1.msra.mxu0 0.0
    %166 = vmatprep.subr.mxu0 0.0
    %167 = vmatpush1.msra.mxu0 0.0
    %168 = vmatprep.subr.mxu0 0.0
    %169 = vmatpush1.msra.mxu0 0.0
    %170 = vmatprep.subr.mxu0 0.0
    %171 = vmatpush1.msra.mxu0 0.0
    %172 = vmatprep.subr.mxu0 0.0
    %173 = vmatpush1.msra.mxu0 0.0
    %174 = vmatprep.subr.mxu0 0.0
    %175 = vmatpush1.msra.mxu0 0.0
    %176 = vmatprep.subr.mxu0 0.0
    %177 = vmatpush1.msra.mxu0 0.0
    %178 = vmatprep.subr.mxu0 0.0
    %179 = vmatpush1.msra.mxu0 0.0
    %180 = vmatprep.subr.mxu0 0.0
    %181 = vmatpush1.msra.mxu0 0.0
    %182 = vmatprep.subr.mxu0 0.0
    %183 = vmatpush1.msra.mxu0 0.0
    %184 = vmatprep.subr.mxu0 0.0
    %185 = vmatpush1.msra.mxu0 0.0
    %186 = vmatprep.subr.mxu0 0.0
    %187 = vmatpush1.msra.mxu0 0.0
    %188 = vmatprep.subr.mxu0 0.0
    %189 = vmatpush1.msra.mxu0 0.0
    %190 = vmatprep.mubr.f32.mxu0 0.0
    %191 = vmatmul.mubr.f32.gmra.mrb[0].mxu0 %v124
    %v192 = vpop.f32.mrb[0].mxu0
    %v193 = vadd.f32 %v119, %v192
    %v194 = vpop.f32.mrb[0].mxu0
    %v195 = vadd.f32 %v119, %v194
    %196 = vdwg.mxu0
    %v197 = vld [vmem:[%s2] sm:$0xff]
    %v198 = vld [vmem:[%s2 + $0x8] sm:$0xff]
    %v199 = vld [vmem:[%s2 + $0x10] sm:$0xff]
    %vm200 = vcmask 64512
    %v202 = vsel %vm200, %v197, 0
    %v205 = vsel %vm200, %v198, 0
    %v208 = vsel %vm200, %v199, 0
    %210 = vmatprep.subr.mxu0 %v195
    %211 = vmatpush1.msra.mxu0 %v193
    %212 = vmatprep.subr.mxu0 0.0
    %213 = vmatpush1.msra.mxu0 0.0
    %214 = vmatprep.subr.mxu0 0.0
    %215 = vmatpush1.msra.mxu0 0.0
    %216 = vmatprep.subr.mxu0 0.0
    %217 = vmatpush1.msra.mxu0 0.0
    %218 = vmatprep.subr.mxu0 0.0
    %219 = vmatpush1.msra.mxu0 0.0
    %220 = vmatprep.subr.mxu0 0.0
    %221 = vmatpush1.msra.mxu0 0.0
    %222 = vmatprep.subr.mxu0 0.0
    %223 = vmatpush1.msra.mxu0 0.0
    %224 = vmatprep.subr.mxu0 0.0
    %225 = vmatpush1.msra.mxu0 0.0
    %226 = vmatprep.subr.mxu0 0.0
    %227 = vmatpush1.msra.mxu0 0.0
    %228 = vmatprep.subr.mxu0 0.0
    %229 = vmatpush1.msra.mxu0 0.0
    %230 = vmatprep.subr.mxu0 0.0
    %231 = vmatpush1.msra.mxu0 0.0
    %232 = vmatprep.subr.mxu0 0.0
    %233 = vmatpush1.msra.mxu0 0.0
    %234 = vmatprep.subr.mxu0 0.0
    %235 = vmatpush1.msra.mxu0 0.0
    %236 = vmatprep.subr.mxu0 0.0
    %237 = vmatpush1.msra.mxu0 0.0
    %238 = vmatprep.subr.mxu0 0.0
    %239 = vmatpush1.msra.mxu0 0.0
    %240 = vmatprep.subr.mxu0 0.0
    %241 = vmatpush1.msra.mxu0 0.0
    %242 = vmatprep.subr.mxu0 0.0
    %243 = vmatpush1.msra.mxu0 0.0
    %244 = vmatprep.subr.mxu0 0.0
    %245 = vmatpush1.msra.mxu0 0.0
    %246 = vmatprep.subr.mxu0 0.0
    %247 = vmatpush1.msra.mxu0 0.0
    %248 = vmatprep.subr.mxu0 0.0
    %249 = vmatpush1.msra.mxu0 0.0
    %250 = vmatprep.subr.mxu0 0.0
    %251 = vmatpush1.msra.mxu0 0.0
    %252 = vmatprep.subr.mxu0 0.0
    %253 = vmatpush1.msra.mxu0 0.0
    %254 = vmatprep.subr.mxu0 0.0
    %255 = vmatpush1.msra.mxu0 0.0
    %256 = vmatprep.subr.mxu0 0.0
    %257 = vmatpush1.msra.mxu0 0.0
    %258 = vmatprep.subr.mxu0 0.0
    %259 = vmatpush1.msra.mxu0 0.0
    %260 = vmatprep.subr.mxu0 0.0
    %261 = vmatpush1.msra.mxu0 0.0
    %262 = vmatprep.subr.mxu0 0.0
    %263 = vmatpush1.msra.mxu0 0.0
    %264 = vmatprep.subr.mxu0 0.0
    %265 = vmatpush1.msra.mxu0 0.0
    %266 = vmatprep.subr.mxu0 0.0
    %267 = vmatpush1.msra.mxu0 0.0
    %268 = vmatprep.subr.mxu0 0.0
    %269 = vmatpush1.msra.mxu0 0.0
    %270 = vmatprep.subr.mxu0 0.0
    %271 = vmatpush1.msra.mxu0 0.0
    %272 = vmatprep.subr.mxu0 0.0
    %273 = vmatpush1.msra.mxu0 0.0
    %274 = vmatprep.mubr.f32.mxu0 0.0
    %275 = vmatmul.mubr.f32.gmra.mrb[0].mxu0 %v202
    %v276 = vpop.f32.mrb[0].mxu0
    %v277 = vadd.f32 0.0, %v276
    %v278 = vpop.f32.mrb[0].mxu0
    %v279 = vadd.f32 0.0, %v278
    %280 = vmatprep.mubr.f32.mxu0 0.0
    %281 = vmatmul.mubr.f32.gmra.mrb[0].mxu0 %v205
    %v282 = vpop.f32.mrb[0].mxu0
    %v283 = vadd.f32 0.0, %v282
    %v284 = vpop.f32.mrb[0].mxu0
    %v285 = vadd.f32 0.0, %v284
    %286 = vmatprep.mubr.f32.mxu0 0.0
    %287 = vmatmul.mubr.f32.gmra.mrb[0].mxu0 %v208
    %v288 = vpop.f32.mrb[0].mxu0
    %v289 = vadd.f32 0.0, %v288
    %v290 = vpop.f32.mrb[0].mxu0
    %v291 = vadd.f32 0.0, %v290
    %292 = vdwg.mxu0
    %293 = vset.pattern.permute.xlu0 1
    %294 = vperm.xlu0 %293, %v17
    %v295 = vpop.permute.xlu0 %294
    %v297 = vadd.f32 %v277, %v295
    %v298 = vadd.f32 %v279, %v295
    %v299 = vadd.f32 %v297, %v18
    %v300 = vadd.f32 %v298, %v19
    %301 = vst [vmem:[#allocation2] sm:$0xff] %v299
    %302 = vst [vmem:[#allocation2 + $0x8] sm:$0xff] %v300
    %303 = vst [vmem:[%s4] sm:$0xff] %v283
    %304 = vst [vmem:[%s4 + $0x8] sm:$0xff] %v285
    %305 = vst [vmem:[%s4 + $0x10] sm:$0xff] %v289
    %306 = vst [vmem:[%s4 + $0x18] sm:$0xff] %v291
    // Predicated region
    $region14: #{wavenet_block.1} parent=1 // pred_check
      _
    $region15: #{wavenet_block.1} parent=1 // pred_check_branch
      %308 = sbr.rel (0) target = $region17
    $region16: #{wavenet_block.1} parent=1 // pred_region
      %s310 = ssub.s32 256, 256
      %311 = vsyncadd [#allocation3], %s310
      %s313 = sshll.u32 [#allocation2], 4
      %s314 = int_to_ptr.vmem [resolvable:$true] %s313
      %316 = dma.vmem_to_hbm [thread:$0]  %s314, 256, %s3, [#allocation3]
    $region17: #{wavenet_block.1} parent=1 // pred_fallthru
      _
    // Predicated region
    $region18: #{wavenet_block.1} parent=1 // pred_check
      _
    $region19: #{wavenet_block.1} parent=1 // pred_check_branch
      %318 = sbr.rel (0) target = $region21
    $region20: #{wavenet_block.1} parent=1 // pred_region
      _
    $region21: #{wavenet_block.1} parent=1 // pred_fallthru
      _
    // Predicated region
    $region22: #{wavenet_block.1} parent=1 // pred_check
      _
    $region23: #{wavenet_block.1} parent=1 // pred_check_branch
      %320 = sbr.rel (0) target = $region25
    $region24: #{wavenet_block.1} parent=1 // pred_region
      %321 = dma.done [#allocation3], 256
    $region25: #{wavenet_block.1} parent=1 // pred_fallthru
      _
    // Predicated region
    $region26: #{wavenet_block.1} parent=1 // pred_check
      _
    $region27: #{wavenet_block.1} parent=1 // pred_check_branch
      %323 = sbr.rel (0) target = $region29
    $region28: #{wavenet_block.1} parent=1 // pred_region
      _
    $region29: #{wavenet_block.1} parent=1 // pred_fallthru
      _
    %324 = vsyncpa [#allocation3], 1

</llo_original>
